<compile_context>
chip_gen: v7x
topology: tpu7x:2x2x1
jax: 0.10.0
libtpu: 0.0.40
codegen_flags: <defaults>
</compile_context>

<pallas_src>
import jax
import jax.numpy as jnp
import numpy as np
from jax import lax
from jax.experimental import pallas as pl
from jax.experimental.pallas import tpu as pltpu


# ------------------------- constant index plumbing --------------------------
# conv2 (2x2, stride 2) output position p = oi*2+oj reads input spatial index
# (2*oi+ki)*4 + (2*oj+kj) through kernel tap k = ki*2+kj.  _SEL[s, p, k] = 1
# iff flat spatial index s equals that position; folded into the conv1 spread.
_SPAT = np.array(
    [[(2 * (pp // 2) + (kk // 2)) * 4 + (2 * (pp % 2) + (kk % 2))
      for kk in range(4)] for pp in range(4)], dtype=np.int32)            # (4,4)
_SEL = (np.arange(16)[:, None, None] == _SPAT[None, :, :]).astype(np.float32)


def _pack_weights(p):
    """Pack PyTorch-layout params into lane-dense matmul operands (all f32)."""
    f32 = jnp.float32
    w1v = p["w1"].reshape(16).astype(f32)                    # conv1 1x1 weights
    # conv1 "spread" matmul: output lane ordering (p, k, c) = p*64 + k*16 + c.
    s_mat = (jnp.asarray(_SEL)[:, :, :, None] * w1v).reshape(16, 256)
    b1t = jnp.tile(p["b1"].astype(f32), 16).reshape(1, 256)
    # conv2: block-diagonal (256,128); rows (p,k,c), cols (p,o).
    w2blk = p["w2"].transpose(2, 3, 1, 0).reshape(64, 32).astype(f32)
    w2p = jnp.kron(jnp.eye(4, dtype=f32), w2blk)
    b2t = jnp.tile(p["b2"].astype(f32), 4).reshape(1, 128)
    # conv3: (128,32); rows (p,c), cols o.
    w3m = p["w3"].transpose(2, 3, 1, 0).reshape(128, 32).astype(f32)
    b3t = p["b3"].astype(f32).reshape(1, 32)
    # l2(l1(.)) folded; kept transposed for the lane-dense (4,TB) output.
    w45t = (p["w5"] @ p["w4"]).astype(f32)                   # (4, 32)
    b45t = (p["w5"] @ p["b4"] + p["b5"]).astype(f32).reshape(4, 1)
    return s_mat, b1t, w2p, b2t, w3m, b3t, w45t, b45t


# ------------------------------ fused kernel --------------------------------

def _dqn_fused_kernel(x_ref, s_ref, b1_ref, w2_ref, b2_ref, w3_ref, b3_ref,
                      w45t_ref, b45t_ref, ot_ref):
    x = x_ref[...].astype(jnp.float32)                                  # (TB,16)
    # conv1 (1x1, 1->16) + ReLU as one lane-dense spread matmul.
    h1 = jnp.maximum(
        jnp.dot(x, s_ref[...], preferred_element_type=jnp.float32) + b1_ref[...],
        0.0)                                                            # (TB,256)
    # conv2 (2x2 s2, 16->32) + ReLU: single K=256 block-diagonal matmul.
    h2 = jnp.maximum(
        jnp.dot(h1, w2_ref[...], preferred_element_type=jnp.float32) + b2_ref[...],
        0.0)                                                            # (TB,128)
    # conv3 (2x2 s2, 32->32) + ReLU: single K=128 matmul.
    h3 = jnp.maximum(
        jnp.dot(h2, w3_ref[...], preferred_element_type=jnp.float32) + b3_ref[...],
        0.0)                                                            # (TB,32)
    # Head (l2.l1 folded), emitted transposed -> lane-dense (4, TB) store.
    ot = lax.dot_general(w45t_ref[...], h3,
                         dimension_numbers=(((1,), (1,)), ((), ())),
                         preferred_element_type=jnp.float32)            # (4,TB)
    ot_ref[...] = ot + b45t_ref[...]


# ------------------------------- forward pass -------------------------------

def _choose_batch_tile(B):
    if B < 256:
        return B                      # single block; no padding, no split
    # >= 2 tiles so ("parallel",) can use both v7x TensorCores; up to 4096
    # rows/tile (~8 MiB live f32 working set) so grid-step overhead amortizes.
    max_tb = 4096
    tb = min(max_tb, -(-B // 2))      # ceil(B / 2)
    return -(-tb // 128) * 128        # lane/sublane aligned


def dqn_forward(x, p):
    """DQN forward for x of shape (B, 4, 4). Returns (B, 4) float32 Q-values."""
    B, H, W = x.shape
    assert H == 4 and W == 4, "DQN.forward requires 4x4 spatial input"

    x16 = x.reshape(B, 16)            # contiguous flatten; no permute copy
    weights = _pack_weights(p)        # tiny; pre-pack once for real inference

    TB = _choose_batch_tile(B)
    grid_n = -(-B // TB)
    Bp = grid_n * TB
    if Bp != B:                       # pad awkward batch sizes (sliced off below)
        x16 = jnp.pad(x16, ((0, Bp - B), (0, 0)))

    # Constant index_map -> weights DMA'd once, VMEM-resident across the grid.
    resident = lambda w: pl.BlockSpec(w.shape, lambda i: (0, 0))

    out_t = pl.pallas_call(
        _dqn_fused_kernel,
        grid=(grid_n,),
        out_shape=jax.ShapeDtypeStruct((4, Bp), jnp.float32),
        in_specs=[pl.BlockSpec((TB, 16), lambda i: (i, 0))]
                 + [resident(w) for w in weights],
        out_specs=pl.BlockSpec((4, TB), lambda i: (0, i)),
        compiler_params=pltpu.CompilerParams(
            dimension_semantics=("parallel",),
            vmem_limit_bytes=(48 * 1024 * 1024 if TB >= 1024 else None)),
    )(x16, *weights)

    return out_t[:, :B].T             # (B, 4)


# --------------------------- params & reference ----------------------------

def init_params(key):
    keys = jax.random.split(key, 10)

    def u(k, shape, fan_in):
        bound = 1.0 / np.sqrt(fan_in)
        return jax.random.uniform(k, shape, jnp.float32, -bound, bound)

    return dict(
        w1=u(keys[0], (16, 1, 1, 1), 1),      b1=u(keys[1], (16,), 1),
        w2=u(keys[2], (32, 16, 2, 2), 64),    b2=u(keys[3], (32,), 64),
        w3=u(keys[4], (32, 32, 2, 2), 128),   b3=u(keys[5], (32,), 128),
        w4=u(keys[6], (256, 32), 32),         b4=u(keys[7], (256,), 32),
        w5=u(keys[8], (4, 256), 256),         b5=u(keys[9], (4,), 256),
    )


def dqn_reference(x, p):
    # Pure-JAX reference (einsum convs) for correctness checking.
    B = x.shape[0]
    xi = x[:, None, :, :]                                            # NCHW
    h1 = jax.nn.relu(jnp.einsum("bchw,oc->bohw", xi, p["w1"].reshape(16, 1))
                     + p["b1"][None, :, None, None])
    h1r = h1.reshape(B, 16, 2, 2, 2, 2)                              # [b,c,oi,ki,oj,kj]
    h2 = jax.nn.relu(jnp.einsum("bcpuqv,ocuv->bopq", h1r, p["w2"])
                     + p["b2"][None, :, None, None])
    h3 = jax.nn.relu(jnp.einsum("bcuv,ocuv->bo", h2, p["w3"]) + p["b3"][None, :])
    h4 = h3 @ p["w4"].T + p["b4"][None, :]
    return h4 @ p["w5"].T + p["b5"][None, :]


if __name__ == "__main__":
    key = jax.random.PRNGKey(0)
    pkey, xkey, xkey2 = jax.random.split(key, 3)
    params = init_params(pkey)
    fwd = jax.jit(dqn_forward)

    # Small f32 batch (single-block path).
    x = jax.random.normal(xkey, (16, 4, 4), dtype=jnp.float32)
    out = jax.block_until_ready(fwd(x, params))
    ref = dqn_reference(x, params)
    np.testing.assert_allclose(np.asarray(out), np.asarray(ref),
                               rtol=1e-2, atol=1e-2)
    assert out.shape == (16, 4) and out.dtype == jnp.float32

    # bf16-input path (halves input DMA on v5e/v6e); kernel computes in f32.
    out_bf16 = jax.block_until_ready(fwd(x.astype(jnp.bfloat16), params))
    np.testing.assert_allclose(np.asarray(out_bf16), np.asarray(ref),
                               rtol=5e-2, atol=5e-2)

    # Non-divisible batch: exercises zero-padding, grid=(2,), parallel tiles.
    xb = jax.random.normal(xkey2, (600, 4, 4), dtype=jnp.float32)
    outb = jax.block_until_ready(fwd(xb, params))
    refb = dqn_reference(xb, params)
    np.testing.assert_allclose(np.asarray(outb), np.asarray(refb),
                               rtol=1e-2, atol=1e-2)
    assert outb.shape == (600, 4)

    print("KERNEL_OK")
</pallas_src>

<mosaic_0001>
module attributes {stable_mosaic.version = 11 : i64} {
  func.func @_dqn_fused_kernel(%arg0: i32, %arg1: memref<16x16xf32, #tpu.memory_space<vmem>>, %arg2: memref<16x256xf32, #tpu.memory_space<vmem>>, %arg3: memref<1x256xf32, #tpu.memory_space<vmem>>, %arg4: memref<256x128xf32, #tpu.memory_space<vmem>>, %arg5: memref<1x128xf32, #tpu.memory_space<vmem>>, %arg6: memref<128x32xf32, #tpu.memory_space<vmem>>, %arg7: memref<1x32xf32, #tpu.memory_space<vmem>>, %arg8: memref<4x32xf32, #tpu.memory_space<vmem>>, %arg9: memref<4x1xf32, #tpu.memory_space<vmem>>, %arg10: memref<4x16xf32, #tpu.memory_space<vmem>>) attributes {dimension_semantics = [#tpu.dimension_semantics<parallel>], iteration_bounds = array<i64: 1>, scalar_prefetch = 0 : i64, scratch_operands = 0 : i64, tpu.core_type = #tpu.core_type<tc>, window_params = [{transform_indices = @transform_0, window_bounds = array<i64: 16, 16>}, {pipeline_mode = #tpu.pipeline_mode<synchronous>, transform_indices = @transform_1, window_bounds = array<i64: 16, 256>}, {pipeline_mode = #tpu.pipeline_mode<synchronous>, transform_indices = @transform_2, window_bounds = array<i64: 1, 256>}, {pipeline_mode = #tpu.pipeline_mode<synchronous>, transform_indices = @transform_3, window_bounds = array<i64: 256, 128>}, {pipeline_mode = #tpu.pipeline_mode<synchronous>, transform_indices = @transform_4, window_bounds = array<i64: 1, 128>}, {pipeline_mode = #tpu.pipeline_mode<synchronous>, transform_indices = @transform_5, window_bounds = array<i64: 128, 32>}, {pipeline_mode = #tpu.pipeline_mode<synchronous>, transform_indices = @transform_6, window_bounds = array<i64: 1, 32>}, {pipeline_mode = #tpu.pipeline_mode<synchronous>, transform_indices = @transform_7, window_bounds = array<i64: 4, 32>}, {pipeline_mode = #tpu.pipeline_mode<synchronous>, transform_indices = @transform_8, window_bounds = array<i64: 4, 1>}, {transform_indices = @transform_9, window_bounds = array<i64: 4, 16>}]} {
    %c0 = arith.constant 0 : index
    %c0_0 = arith.constant 0 : index
    %0 = vector.load %arg1[%c0, %c0_0] : memref<16x16xf32, #tpu.memory_space<vmem>>, vector<16x16xf32>
    %c0_1 = arith.constant 0 : index
    %c0_2 = arith.constant 0 : index
    %1 = vector.load %arg2[%c0_1, %c0_2] : memref<16x256xf32, #tpu.memory_space<vmem>>, vector<16x256xf32>
    %cst = arith.constant dense<0.000000e+00> : vector<16x256xf32>
    %2 = tpu.matmul %0, %1, %cst {dimension_numbers = #tpu.dot_dimension_numbers<[1], [0], [0], [1], [0, 0, 1, 1], [], []>} : vector<16x16xf32>, vector<16x256xf32>, vector<16x256xf32> -> vector<16x256xf32>
    %c0_3 = arith.constant 0 : index
    %c0_4 = arith.constant 0 : index
    %3 = vector.load %arg3[%c0_3, %c0_4] : memref<1x256xf32, #tpu.memory_space<vmem>>, vector<1x256xf32>
    %4 = vector.broadcast %3 : vector<1x256xf32> to vector<16x256xf32>
    %5 = arith.addf %2, %4 : vector<16x256xf32>
    %cst_5 = arith.constant 0.000000e+00 : f32
    %6 = vector.broadcast %cst_5 : f32 to vector<16x256xf32>
    %7 = arith.maximumf %5, %6 : vector<16x256xf32>
    %c0_6 = arith.constant 0 : index
    %c0_7 = arith.constant 0 : index
    %8 = vector.load %arg4[%c0_6, %c0_7] : memref<256x128xf32, #tpu.memory_space<vmem>>, vector<256x128xf32>
    %cst_8 = arith.constant dense<0.000000e+00> : vector<16x128xf32>
    %9 = tpu.matmul %7, %8, %cst_8 {dimension_numbers = #tpu.dot_dimension_numbers<[1], [0], [0], [1], [0, 0, 1, 1], [], []>} : vector<16x256xf32>, vector<256x128xf32>, vector<16x128xf32> -> vector<16x128xf32>
    %c0_9 = arith.constant 0 : index
    %c0_10 = arith.constant 0 : index
    %10 = vector.load %arg5[%c0_9, %c0_10] : memref<1x128xf32, #tpu.memory_space<vmem>>, vector<1x128xf32>
    %11 = vector.broadcast %10 : vector<1x128xf32> to vector<16x128xf32>
    %12 = arith.addf %9, %11 : vector<16x128xf32>
    %cst_11 = arith.constant 0.000000e+00 : f32
    %13 = vector.broadcast %cst_11 : f32 to vector<16x128xf32>
    %14 = arith.maximumf %12, %13 : vector<16x128xf32>
    %c0_12 = arith.constant 0 : index
    %c0_13 = arith.constant 0 : index
    %15 = vector.load %arg6[%c0_12, %c0_13] : memref<128x32xf32, #tpu.memory_space<vmem>>, vector<128x32xf32>
    %cst_14 = arith.constant dense<0.000000e+00> : vector<16x32xf32>
    %16 = tpu.matmul %14, %15, %cst_14 {dimension_numbers = #tpu.dot_dimension_numbers<[1], [0], [0], [1], [0, 0, 1, 1], [], []>} : vector<16x128xf32>, vector<128x32xf32>, vector<16x32xf32> -> vector<16x32xf32>
    %c0_15 = arith.constant 0 : index
    %c0_16 = arith.constant 0 : index
    %17 = vector.load %arg7[%c0_15, %c0_16] : memref<1x32xf32, #tpu.memory_space<vmem>>, vector<1x32xf32>
    %18 = vector.broadcast %17 : vector<1x32xf32> to vector<16x32xf32>
    %19 = arith.addf %16, %18 : vector<16x32xf32>
    %cst_17 = arith.constant 0.000000e+00 : f32
    %20 = vector.broadcast %cst_17 : f32 to vector<16x32xf32>
    %21 = arith.maximumf %19, %20 : vector<16x32xf32>
    %c0_18 = arith.constant 0 : index
    %c0_19 = arith.constant 0 : index
    %22 = vector.load %arg8[%c0_18, %c0_19] : memref<4x32xf32, #tpu.memory_space<vmem>>, vector<4x32xf32>
    %cst_20 = arith.constant dense<0.000000e+00> : vector<4x16xf32>
    %23 = tpu.matmul %22, %21, %cst_20 {dimension_numbers = #tpu.dot_dimension_numbers<[1], [1], [0], [0], [0, 0, 1, 0], [], []>} : vector<4x32xf32>, vector<16x32xf32>, vector<4x16xf32> -> vector<4x16xf32>
    %c0_21 = arith.constant 0 : index
    %c0_22 = arith.constant 0 : index
    %24 = vector.load %arg9[%c0_21, %c0_22] : memref<4x1xf32, #tpu.memory_space<vmem>>, vector<4x1xf32>
    %25 = vector.broadcast %24 : vector<4x1xf32> to vector<4x16xf32>
    %26 = arith.addf %23, %25 : vector<4x16xf32>
    %c0_23 = arith.constant 0 : index
    %c0_24 = arith.constant 0 : index
    %27 = vector.load %arg10[%c0_23, %c0_24] : memref<4x16xf32, #tpu.memory_space<vmem>>, vector<4x16xf32>
    tpu.vector_store %arg10[%c0_23, %c0_24], %26 {strides = array<i32>} : memref<4x16xf32, #tpu.memory_space<vmem>>, vector<4x16xf32>,
    return
  }
  func.func @transform_0(%arg0: i32) -> (i32, i32) {
    %c0_i32 = arith.constant 0 : i32
    %c0_i32_0 = arith.constant 0 : i32
    return %arg0, %c0_i32 : i32, i32
  }
  func.func @transform_1(%arg0: i32) -> (i32, i32) {
    %c0_i32 = arith.constant 0 : i32
    %c0_i32_0 = arith.constant 0 : i32
    %c0_i32_1 = arith.constant 0 : i32
    return %c0_i32, %c0_i32_0 : i32, i32
  }
  func.func @transform_2(%arg0: i32) -> (i32, i32) {
    %c0_i32 = arith.constant 0 : i32
    %c0_i32_0 = arith.constant 0 : i32
    %c0_i32_1 = arith.constant 0 : i32
    return %c0_i32, %c0_i32_0 : i32, i32
  }
  func.func @transform_3(%arg0: i32) -> (i32, i32) {
    %c0_i32 = arith.constant 0 : i32
    %c0_i32_0 = arith.constant 0 : i32
    %c0_i32_1 = arith.constant 0 : i32
    return %c0_i32, %c0_i32_0 : i32, i32
  }
  func.func @transform_4(%arg0: i32) -> (i32, i32) {
    %c0_i32 = arith.constant 0 : i32
    %c0_i32_0 = arith.constant 0 : i32
    %c0_i32_1 = arith.constant 0 : i32
    return %c0_i32, %c0_i32_0 : i32, i32
  }
  func.func @transform_5(%arg0: i32) -> (i32, i32) {
    %c0_i32 = arith.constant 0 : i32
    %c0_i32_0 = arith.constant 0 : i32
    %c0_i32_1 = arith.constant 0 : i32
    return %c0_i32, %c0_i32_0 : i32, i32
  }
  func.func @transform_6(%arg0: i32) -> (i32, i32) {
    %c0_i32 = arith.constant 0 : i32
    %c0_i32_0 = arith.constant 0 : i32
    %c0_i32_1 = arith.constant 0 : i32
    return %c0_i32, %c0_i32_0 : i32, i32
  }
  func.func @transform_7(%arg0: i32) -> (i32, i32) {
    %c0_i32 = arith.constant 0 : i32
    %c0_i32_0 = arith.constant 0 : i32
    %c0_i32_1 = arith.constant 0 : i32
    return %c0_i32, %c0_i32_0 : i32, i32
  }
  func.func @transform_8(%arg0: i32) -> (i32, i32) {
    %c0_i32 = arith.constant 0 : i32
    %c0_i32_0 = arith.constant 0 : i32
    %c0_i32_1 = arith.constant 0 : i32
    return %c0_i32, %c0_i32_0 : i32, i32
  }
  func.func @transform_9(%arg0: i32) -> (i32, i32) {
    %c0_i32 = arith.constant 0 : i32
    %c0_i32_0 = arith.constant 0 : i32
    return %c0_i32, %arg0 : i32, i32
  }
}

</mosaic_0001>

<llo_original>
// kernel: tile.13
$region0: #{tile.13}
  #allocation0 [shape = 's32[1]{0}', space=sflag, size = 0x4, scoped, tag = 'scoped memory for tile.13']
  %s0 = inlined_call_operand.vmem [shape: f32[16], index: 0, kind: input, shape index: {}]
  %s1 = inlined_call_operand.vmem [shape: f32[16,16], index: 1, kind: output, shape index: {}]
  // Predicated region
  $region2: #{tile.13} parent=0 // pred_check
    _
  $region3: #{tile.13} parent=0 // pred_check_branch
    %3 = sbr.rel (0) target = $region5
  $region4: #{tile.13} parent=0 // pred_region
    _
  $region5: #{tile.13} parent=0 // pred_fallthru
    _
  %v4 = vld [vmem:[%s0] ss:$0 sm:$0xff]
  %5 = vst [vmem:[%s1] sm:$0xff] %v4
  %s6 = scalar_lea.vmem %s1, 8
  %7 = vst [vmem:[%s6] sm:$0xff] %v4

// kernel: tile.14
$region0: #{tile.14}
  %s0 = inlined_call_operand.vmem [shape: f32[16,16], index: 0, kind: input, shape index: {}]
  %s1 = inlined_call_operand.vmem [shape: f32[1,256], index: 1, kind: output, shape index: {}]
  $region1: #{tile.14} parent=0
    #allocation0 [shape = 'u8[8192]{0}', space=vmem, size = 0x2000, scoped, tag = 'scoped mem for output reshape']
    %s2 = smov 3
    %v3 = vld [vmem:[%s0] ss:$8 sm:%s2]
    %vm4 = vcmask 130048
    %5 = vst.msk [vmem:[#allocation0] ss:$8 sm:$0x3] %vm4, %v3
    %s6 = scalar_lea.vmem %s0, 7
    %s7 = smov 3
    %v8 = vld [vmem:[%s6] ss:$8 sm:%s7]
    %9 = vrot.lane.b32.xlu0 %v8, 112
    %v10 = vpop.permute.xlu0 %9
    %vm11 = vcmask 1048448
    %12 = vst.msk [vmem:[#allocation0] ss:$8 sm:$0x3] %vm11, %v10
    %s13 = scalar_lea.vmem %s0, 6
    %s14 = smov 3
    %v15 = vld [vmem:[%s13] ss:$8 sm:%s14]
    %16 = vrot.lane.b32.xlu0 %v15, 96
    %v17 = vpop.permute.xlu0 %16
    %vm18 = vcmask 917248
    %19 = vst.msk [vmem:[#allocation0] ss:$8 sm:$0x3] %vm18, %v17
    %s20 = scalar_lea.vmem %s0, 5
    %s21 = smov 3
    %v22 = vld [vmem:[%s20] ss:$8 sm:%s21]
    %23 = vrot.lane.b32.xlu0 %v22, 80
    %v24 = vpop.permute.xlu0 %23
    %vm25 = vcmask 786048
    %26 = vst.msk [vmem:[#allocation0] ss:$8 sm:$0x3] %vm25, %v24
    %s27 = scalar_lea.vmem %s0, 4
    %s28 = smov 3
    %v29 = vld [vmem:[%s27] ss:$8 sm:%s28]
    %30 = vrot.lane.b32.xlu0 %v29, 64
    %v31 = vpop.permute.xlu0 %30
    %vm32 = vcmask 654848
    %33 = vst.msk [vmem:[#allocation0] ss:$8 sm:$0x3] %vm32, %v31
    %s34 = scalar_lea.vmem %s0, 3
    %s35 = smov 3
    %v36 = vld [vmem:[%s34] ss:$8 sm:%s35]
    %37 = vrot.lane.b32.xlu0 %v36, 48
    %v38 = vpop.permute.xlu0 %37
    %vm39 = vcmask 523648
    %40 = vst.msk [vmem:[#allocation0] ss:$8 sm:$0x3] %vm39, %v38
    %s41 = scalar_lea.vmem %s0, 2
    %s42 = smov 3
    %v43 = vld [vmem:[%s41] ss:$8 sm:%s42]
    %44 = vrot.lane.b32.xlu0 %v43, 32
    %v45 = vpop.permute.xlu0 %44
    %vm46 = vcmask 392448
    %47 = vst.msk [vmem:[#allocation0] ss:$8 sm:$0x3] %vm46, %v45
    %s48 = scalar_lea.vmem %s0, 1
    %s49 = smov 3
    %v50 = vld [vmem:[%s48] ss:$8 sm:%s49]
    %51 = vrot.lane.b32.xlu0 %v50, 16
    %v52 = vpop.permute.xlu0 %51
    %vm53 = vcmask 261248
    %54 = vst.msk [vmem:[#allocation0] ss:$8 sm:$0x3] %vm53, %v52
    %s56 = sshllo.u32 0, 1
    %v58 = vld [vmem:[#allocation0] sm:%s56]
    %s59 = sshllo.u32 0, 1
    %60 = vst [vmem:[%s1] sm:%s59] %v58
    %s61 = scalar_lea.vmem [#allocation0], 8
    %v62 = vld [vmem:[%s61] sm:%s56]
    %s63 = sshllo.u32 0, 1
    %s64 = scalar_lea.vmem %s1, 1
    %65 = vst [vmem:[%s64] sm:%s63] %v62

// kernel: tile.18
$region0: #{tile.18}
  #allocation0 [shape = 's32[1]{0}', space=sflag, size = 0x4, scoped, tag = 'scoped memory for tile.18']
  %s0 = inlined_call_operand.vmem [shape: f32[32], index: 0, kind: input, shape index: {}]
  %s1 = inlined_call_operand.vmem [shape: f32[4,32], index: 1, kind: output, shape index: {}]
  // Predicated region
  $region2: #{tile.18} parent=0 // pred_check
    _
  $region3: #{tile.18} parent=0 // pred_check_branch
    %3 = sbr.rel (0) target = $region5
  $region4: #{tile.18} parent=0 // pred_region
    _
  $region5: #{tile.18} parent=0 // pred_fallthru
    _
  %v4 = vld [vmem:[%s0] ss:$0 sm:$0xff]
  %5 = vst [vmem:[%s1] sm:$0xf] %v4

// kernel: tile.19
$region0: #{tile.19}
  %s0 = inlined_call_operand.vmem [shape: f32[4,32], index: 0, kind: input, shape index: {}]
  %s1 = inlined_call_operand.vmem [shape: f32[1,128], index: 1, kind: output, shape index: {}]
  $region1: #{tile.19} parent=0
    #allocation0 [shape = 'u8[4096]{0}', space=vmem, size = 0x1000, scoped, tag = 'scoped mem for output reshape']
    #allocation1 [shape = 'u8[4096]{0}', space=vmem, size = 0x1000, scoped, tag = 'scoped mem for input reshape']
    %s3 = sshllo.u32 0, 4
    %v4 = vld [vmem:[%s0] sm:%s3]
    %5 = vst [vmem:[#allocation1] sm:%s3] %v4
    %v6 = vld [vmem:[#allocation1] sm:$0x1]
    %vm7 = vcmask 261120
    %8 = vst.msk [vmem:[#allocation0] sm:$0x1] %vm7, %v6
    %s9 = scalar_lea.vmem [#allocation1], 3
    %v10 = vld [vmem:[%s9] sm:$0x1]
    %11 = vrot.lane.b32.xlu0 %v10, 96
    %v12 = vpop.permute.xlu0 %11
    %vm13 = vcmask 1048320
    %14 = vst.msk [vmem:[#allocation0] sm:$0x1] %vm13, %v12
    %s15 = scalar_lea.vmem [#allocation1], 2
    %v16 = vld [vmem:[%s15] sm:$0x1]
    %17 = vrot.lane.b32.xlu0 %v16, 64
    %v18 = vpop.permute.xlu0 %17
    %vm19 = vcmask 785920
    %20 = vst.msk [vmem:[#allocation0] sm:$0x1] %vm19, %v18
    %s21 = scalar_lea.vmem [#allocation1], 1
    %v22 = vld [vmem:[%s21] sm:$0x1]
    %23 = vrot.lane.b32.xlu0 %v22, 32
    %v24 = vpop.permute.xlu0 %23
    %vm25 = vcmask 523520
    %26 = vst.msk [vmem:[#allocation0] sm:$0x1] %vm25, %v24
    %s28 = sshllo.u32 0, 1
    %v30 = vld [vmem:[#allocation0] sm:%s28]
    %s31 = sshllo.u32 0, 1
    %32 = vst [vmem:[%s1] sm:%s31] %v30

// kernel: dqn_forward.1
$region0: #{dqn_forward.1}
  #allocation0 [shape = 'u32[]', space=smem, size = 0x4, offset = 0x4, fixed_abs, tag = 'smem constant byte address 0x4 - core index']
  #allocation1 [shape = 'u32[144,128]{1,0:T(1,128)}', space=vmem, size = 0x12000, scoped, tag = 'internal scratch']
  %s0 = inlined_call_operand.vmem [shape: f32[16,16], index: 0, kind: input, shape index: {}]
  %s1 = inlined_call_operand.vmem [shape: f32[16,256], index: 1, kind: input, shape index: {}]
  %s2 = inlined_call_operand.vmem [shape: f32[1,256], index: 2, kind: input, shape index: {}]
  %s3 = inlined_call_operand.vmem [shape: f32[256,128], index: 3, kind: input, shape index: {}]
  %s4 = inlined_call_operand.vmem [shape: f32[1,128], index: 4, kind: input, shape index: {}]
  %s5 = inlined_call_operand.vmem [shape: f32[128,32], index: 5, kind: input, shape index: {}]
  %s6 = inlined_call_operand.vmem [shape: f32[1,32], index: 6, kind: input, shape index: {}]
  %s7 = inlined_call_operand.vmem [shape: f32[4,32], index: 7, kind: input, shape index: {}]
  %s8 = inlined_call_operand.vmem [shape: f32[4,1], index: 8, kind: input, shape index: {}]
  %s9 = inlined_call_operand.hbm [shape: f32[4,16], index: 9, kind: output, shape index: {}]
  %s10 = sld [smem:[#allocation0]]
  $region46: #{dqn_forward.1} parent=0
    _
  %s12 = ssub.s32 1, %s10
  %s13 = scalar_select 0, %s12, %s10
  $region1: #{dqn_forward.1} parent=0
    #allocation2 [shape = 'u8[2048]{0}', space=vmem, size = 0x800, scoped, tag = 'output window, operand 0, single buffered']
    #allocation3 [shape = 's32[1]{0}', space=sflag, size = 0x4, scoped, tag = 'scoped memory for dqn_forward.1']
    %14 = vsyncpa [#allocation3], 0
    // Predicated region
    $region2: #{dqn_forward.1} parent=1 // pred_check
      _
    $region3: #{dqn_forward.1} parent=1 // pred_check_branch
      %16 = sbr.rel (0) target = $region5
    $region4: #{dqn_forward.1} parent=1 // pred_region
      _
    $region5: #{dqn_forward.1} parent=1 // pred_fallthru
      _
    // Predicated region
    $region6: #{dqn_forward.1} parent=1 // pred_check
      _
    $region7: #{dqn_forward.1} parent=1 // pred_check_branch
      %18 = sbr.rel (0) target = $region9
    $region8: #{dqn_forward.1} parent=1 // pred_region
      _
    $region9: #{dqn_forward.1} parent=1 // pred_fallthru
      _
    // Predicated region
    $region10: #{dqn_forward.1} parent=1 // pred_check
      _
    $region11: #{dqn_forward.1} parent=1 // pred_check_branch
      %20 = sbr.rel (0) target = $region13
    $region12: #{dqn_forward.1} parent=1 // pred_region
      _
    $region13: #{dqn_forward.1} parent=1 // pred_fallthru
      _
    // Predicated region
    $region14: #{dqn_forward.1} parent=1 // pred_check
      _
    $region15: #{dqn_forward.1} parent=1 // pred_check_branch
      %22 = sbr.rel (0) target = $region17
    $region16: #{dqn_forward.1} parent=1 // pred_region
      _
    $region17: #{dqn_forward.1} parent=1 // pred_fallthru
      _
    // Predicated region
    $region18: #{dqn_forward.1} parent=1 // pred_check
      _
    $region19: #{dqn_forward.1} parent=1 // pred_check_branch
      %24 = sbr.rel (0) target = $region21
    $region20: #{dqn_forward.1} parent=1 // pred_region
      _
    $region21: #{dqn_forward.1} parent=1 // pred_fallthru
      _
    // Predicated region
    $region22: #{dqn_forward.1} parent=1 // pred_check
      _
    $region23: #{dqn_forward.1} parent=1 // pred_check_branch
      %26 = sbr.rel (0) target = $region25
    $region24: #{dqn_forward.1} parent=1 // pred_region
      _
    $region25: #{dqn_forward.1} parent=1 // pred_fallthru
      _
    // Predicated region
    $region26: #{dqn_forward.1} parent=1 // pred_check
      _
    $region27: #{dqn_forward.1} parent=1 // pred_check_branch
      %28 = sbr.rel (0) target = $region29
    $region28: #{dqn_forward.1} parent=1 // pred_region
      _
    $region29: #{dqn_forward.1} parent=1 // pred_fallthru
      _
    // Predicated region
    $region30: #{dqn_forward.1} parent=1 // pred_check
      _
    $region31: #{dqn_forward.1} parent=1 // pred_check_branch
      %30 = sbr.rel (0) target = $region33
    $region32: #{dqn_forward.1} parent=1 // pred_region
      _
    $region33: #{dqn_forward.1} parent=1 // pred_fallthru
      _
    // Predicated region
    $region34: #{dqn_forward.1} parent=1 // pred_check
      _
    $region35: #{dqn_forward.1} parent=1 // pred_check_branch
      %32 = sbr.rel (0) target = $region37
    $region36: #{dqn_forward.1} parent=1 // pred_region
      _
    $region37: #{dqn_forward.1} parent=1 // pred_fallthru
      _
    %v33 = vld [vmem:[%s0] sm:$0xff]
    %v34 = vld [vmem:[%s0 + $0x8] sm:$0xff]
    %v35 = vld [vmem:[%s1] sm:$0xff]
    %v36 = vld [vmem:[%s1 + $0x8] sm:$0xff]
    %v37 = vld [vmem:[%s1 + $0x10] sm:$0xff]
    %v38 = vld [vmem:[%s1 + $0x18] sm:$0xff]
    %v39 = vld [vmem:[%s2] sm:$0x3]
    %v41 = vlaneseq
    %v42 = vshrl.u32 %v41, 7
    %v43 = vsub.s32 0, %v42
    %v44 = vrot.slane %v39, %v43
    %v45 = vlaneseq
    %v46 = vshrl.u32 %v45, 7
    %v47 = vsub.s32 1, %v46
    %v48 = vrot.slane %v39, %v47
    %vm51 = vcmask 130048
    %v53 = vsel %vm51, %v33, 0
    %v56 = vsel %vm51, %v34, 0
    %58 = vmatprep.subr.mxu0 %v36
    %59 = vmatpush1.msra.mxu0 %v35
    %60 = vmatprep.subr.mxu0 %v38
    %61 = vmatpush1.msra.mxu0 %v37
    %62 = vmatprep.subr.mxu0 0.0
    %63 = vmatpush1.msra.mxu0 0.0
    %64 = vmatprep.subr.mxu0 0.0
    %65 = vmatpush1.msra.mxu0 0.0
    %66 = vmatprep.subr.mxu0 0.0
    %67 = vmatpush1.msra.mxu0 0.0
    %68 = vmatprep.subr.mxu0 0.0
    %69 = vmatpush1.msra.mxu0 0.0
    %70 = vmatprep.subr.mxu0 0.0
    %71 = vmatpush1.msra.mxu0 0.0
    %72 = vmatprep.subr.mxu0 0.0
    %73 = vmatpush1.msra.mxu0 0.0
    %74 = vmatprep.subr.mxu0 0.0
    %75 = vmatpush1.msra.mxu0 0.0
    %76 = vmatprep.subr.mxu0 0.0
    %77 = vmatpush1.msra.mxu0 0.0
    %78 = vmatprep.subr.mxu0 0.0
    %79 = vmatpush1.msra.mxu0 0.0
    %80 = vmatprep.subr.mxu0 0.0
    %81 = vmatpush1.msra.mxu0 0.0
    %82 = vmatprep.subr.mxu0 0.0
    %83 = vmatpush1.msra.mxu0 0.0
    %84 = vmatprep.subr.mxu0 0.0
    %85 = vmatpush1.msra.mxu0 0.0
    %86 = vmatprep.subr.mxu0 0.0
    %87 = vmatpush1.msra.mxu0 0.0
    %88 = vmatprep.subr.mxu0 0.0
    %89 = vmatpush1.msra.mxu0 0.0
    %90 = vmatprep.subr.mxu0 0.0
    %91 = vmatpush1.msra.mxu0 0.0
    %92 = vmatprep.subr.mxu0 0.0
    %93 = vmatpush1.msra.mxu0 0.0
    %94 = vmatprep.subr.mxu0 0.0
    %95 = vmatpush1.msra.mxu0 0.0
    %96 = vmatprep.subr.mxu0 0.0
    %97 = vmatpush1.msra.mxu0 0.0
    %98 = vmatprep.subr.mxu0 0.0
    %99 = vmatpush1.msra.mxu0 0.0
    %100 = vmatprep.subr.mxu0 0.0
    %101 = vmatpush1.msra.mxu0 0.0
    %102 = vmatprep.subr.mxu0 0.0
    %103 = vmatpush1.msra.mxu0 0.0
    %104 = vmatprep.subr.mxu0 0.0
    %105 = vmatpush1.msra.mxu0 0.0
    %106 = vmatprep.subr.mxu0 0.0
    %107 = vmatpush1.msra.mxu0 0.0
    %108 = vmatprep.subr.mxu0 0.0
    %109 = vmatpush1.msra.mxu0 0.0
    %110 = vmatprep.subr.mxu0 0.0
    %111 = vmatpush1.msra.mxu0 0.0
    %112 = vmatprep.subr.mxu0 0.0
    %113 = vmatpush1.msra.mxu0 0.0
    %114 = vmatprep.subr.mxu0 0.0
    %115 = vmatpush1.msra.mxu0 0.0
    %116 = vmatprep.subr.mxu0 0.0
    %117 = vmatpush1.msra.mxu0 0.0
    %118 = vmatprep.subr.mxu0 0.0
    %119 = vmatpush1.msra.mxu0 0.0
    %120 = vmatprep.subr.mxu0 0.0
    %121 = vmatpush1.msra.mxu0 0.0
    %122 = vmatprep.mubr.f32.mxu0 0.0
    %123 = vmatmul.mubr.f32.gmra.mrb[0].mxu0 %v53
    %v124 = vpop.f32.mrb[0].mxu0
    %v125 = vadd.f32 %v44, %v124
    %v126 = vpop.f32.mrb[0].mxu0
    %v127 = vadd.f32 %v48, %v126
    %128 = vmatprep.mubr.f32.mxu0 0.0
    %129 = vmatmul.mubr.f32.gmra.mrb[0].mxu0 %v56
    %v130 = vpop.f32.mrb[0].mxu0
    %v131 = vadd.f32 %v44, %v130
    %v132 = vpop.f32.mrb[0].mxu0
    %v133 = vadd.f32 %v48, %v132
    %134 = vdwg.mxu0
    %v135 = vmax.f32 %v125, 0.0
    %v136 = vmax.f32 %v127, 0.0
    %v137 = vmax.f32 %v131, 0.0
    %v138 = vmax.f32 %v133, 0.0
    %v139 = vld [vmem:[%s3] sm:$0xff]
    %v140 = vld [vmem:[%s3 + $0x8] sm:$0xff]
    %v141 = vld [vmem:[%s3 + $0x10] sm:$0xff]
    %v142 = vld [vmem:[%s3 + $0x18] sm:$0xff]
    %v143 = vld [vmem:[%s3 + $0x20] sm:$0xff]
    %v144 = vld [vmem:[%s3 + $0x28] sm:$0xff]
    %v145 = vld [vmem:[%s3 + $0x30] sm:$0xff]
    %v146 = vld [vmem:[%s3 + $0x38] sm:$0xff]
    %v147 = vld [vmem:[%s3 + $0x40] sm:$0xff]
    %v148 = vld [vmem:[%s3 + $0x48] sm:$0xff]
    %v149 = vld [vmem:[%s3 + $0x50] sm:$0xff]
    %v150 = vld [vmem:[%s3 + $0x58] sm:$0xff]
    %v151 = vld [vmem:[%s3 + $0x60] sm:$0xff]
    %v152 = vld [vmem:[%s3 + $0x68] sm:$0xff]
    %v153 = vld [vmem:[%s3 + $0x70] sm:$0xff]
    %v154 = vld [vmem:[%s3 + $0x78] sm:$0xff]
    %v155 = vld [vmem:[%s3 + $0x80] sm:$0xff]
    %v156 = vld [vmem:[%s3 + $0x88] sm:$0xff]
    %v157 = vld [vmem:[%s3 + $0x90] sm:$0xff]
    %v158 = vld [vmem:[%s3 + $0x98] sm:$0xff]
    %v159 = vld [vmem:[%s3 + $0xa0] sm:$0xff]
    %v160 = vld [vmem:[%s3 + $0xa8] sm:$0xff]
    %v161 = vld [vmem:[%s3 + $0xb0] sm:$0xff]
    %v162 = vld [vmem:[%s3 + $0xb8] sm:$0xff]
    %v163 = vld [vmem:[%s3 + $0xc0] sm:$0xff]
    %v164 = vld [vmem:[%s3 + $0xc8] sm:$0xff]
    %v165 = vld [vmem:[%s3 + $0xd0] sm:$0xff]
    %v166 = vld [vmem:[%s3 + $0xd8] sm:$0xff]
    %v167 = vld [vmem:[%s3 + $0xe0] sm:$0xff]
    %v168 = vld [vmem:[%s3 + $0xe8] sm:$0xff]
    %v169 = vld [vmem:[%s3 + $0xf0] sm:$0xff]
    %v170 = vld [vmem:[%s3 + $0xf8] sm:$0xff]
    %v171 = vld [vmem:[%s4] sm:$0x1]
    %v173 = vlaneseq
    %v174 = vshrl.u32 %v173, 7
    %v175 = vsub.s32 0, %v174
    %v176 = vrot.slane %v171, %v175
    %178 = vmatprep.subr.mxu0 0.0
    %179 = vmatpush1.msra.mxu0 %v139
    %180 = vmatprep.subr.mxu0 0.0
    %181 = vmatpush1.msra.mxu0 %v140
    %182 = vmatprep.subr.mxu0 0.0
    %183 = vmatpush1.msra.mxu0 %v141
    %184 = vmatprep.subr.mxu0 0.0
    %185 = vmatpush1.msra.mxu0 %v142
    %186 = vmatprep.subr.mxu0 0.0
    %187 = vmatpush1.msra.mxu0 %v143
    %188 = vmatprep.subr.mxu0 0.0
    %189 = vmatpush1.msra.mxu0 %v144
    %190 = vmatprep.subr.mxu0 0.0
    %191 = vmatpush1.msra.mxu0 %v145
    %192 = vmatprep.subr.mxu0 0.0
    %193 = vmatpush1.msra.mxu0 %v146
    %194 = vmatprep.subr.mxu0 0.0
    %195 = vmatpush1.msra.mxu0 %v147
    %196 = vmatprep.subr.mxu0 0.0
    %197 = vmatpush1.msra.mxu0 %v148
    %198 = vmatprep.subr.mxu0 0.0
    %199 = vmatpush1.msra.mxu0 %v149
    %200 = vmatprep.subr.mxu0 0.0
    %201 = vmatpush1.msra.mxu0 %v150
    %202 = vmatprep.subr.mxu0 0.0
    %203 = vmatpush1.msra.mxu0 %v151
    %204 = vmatprep.subr.mxu0 0.0
    %205 = vmatpush1.msra.mxu0 %v152
    %206 = vmatprep.subr.mxu0 0.0
    %207 = vmatpush1.msra.mxu0 %v153
    %208 = vmatprep.subr.mxu0 0.0
    %209 = vmatpush1.msra.mxu0 %v154
    %210 = vmatprep.subr.mxu0 0.0
    %211 = vmatpush1.msra.mxu0 %v155
    %212 = vmatprep.subr.mxu0 0.0
    %213 = vmatpush1.msra.mxu0 %v156
    %214 = vmatprep.subr.mxu0 0.0
    %215 = vmatpush1.msra.mxu0 %v157
    %216 = vmatprep.subr.mxu0 0.0
    %217 = vmatpush1.msra.mxu0 %v158
    %218 = vmatprep.subr.mxu0 0.0
    %219 = vmatpush1.msra.mxu0 %v159
    %220 = vmatprep.subr.mxu0 0.0
    %221 = vmatpush1.msra.mxu0 %v160
    %222 = vmatprep.subr.mxu0 0.0
    %223 = vmatpush1.msra.mxu0 %v161
    %224 = vmatprep.subr.mxu0 0.0
    %225 = vmatpush1.msra.mxu0 %v162
    %226 = vmatprep.subr.mxu0 0.0
    %227 = vmatpush1.msra.mxu0 %v163
    %228 = vmatprep.subr.mxu0 0.0
    %229 = vmatpush1.msra.mxu0 %v164
    %230 = vmatprep.subr.mxu0 0.0
    %231 = vmatpush1.msra.mxu0 %v165
    %232 = vmatprep.subr.mxu0 0.0
    %233 = vmatpush1.msra.mxu0 %v166
    %234 = vmatprep.subr.mxu0 0.0
    %235 = vmatpush1.msra.mxu0 %v167
    %236 = vmatprep.subr.mxu0 0.0
    %237 = vmatpush1.msra.mxu0 %v168
    %238 = vmatprep.subr.mxu0 0.0
    %239 = vmatpush1.msra.mxu0 %v169
    %240 = vmatprep.subr.mxu0 0.0
    %241 = vmatpush1.msra.mxu0 %v170
    %242 = vmatprep.mubr.f32.mxu0 %v136
    %243 = vmatmul.mubr.f32.gmra.mrb[0].mxu0 %v135
    %v244 = vpop.f32.mrb[0].mxu0
    %v245 = vadd.f32 %v176, %v244
    %v246 = vpop.f32.mrb[0].mxu0
    %247 = vmatprep.mubr.f32.mxu0 %v138
    %248 = vmatmul.mubr.f32.gmra.mrb[0].mxu0 %v137
    %v249 = vpop.f32.mrb[0].mxu0
    %v250 = vadd.f32 %v176, %v249
    %v251 = vpop.f32.mrb[0].mxu0
    %252 = vdwg.mxu0
    %v253 = vmax.f32 %v245, 0.0
    %v254 = vmax.f32 %v250, 0.0
    %v255 = vld [vmem:[%s5] sm:$0xff]
    %v256 = vld [vmem:[%s5 + $0x8] sm:$0xff]
    %v257 = vld [vmem:[%s5 + $0x10] sm:$0xff]
    %v258 = vld [vmem:[%s5 + $0x18] sm:$0xff]
    %v259 = vld [vmem:[%s5 + $0x20] sm:$0xff]
    %v260 = vld [vmem:[%s5 + $0x28] sm:$0xff]
    %v261 = vld [vmem:[%s5 + $0x30] sm:$0xff]
    %v262 = vld [vmem:[%s5 + $0x38] sm:$0xff]
    %v263 = vld [vmem:[%s5 + $0x40] sm:$0xff]
    %v264 = vld [vmem:[%s5 + $0x48] sm:$0xff]
    %v265 = vld [vmem:[%s5 + $0x50] sm:$0xff]
    %v266 = vld [vmem:[%s5 + $0x58] sm:$0xff]
    %v267 = vld [vmem:[%s5 + $0x60] sm:$0xff]
    %v268 = vld [vmem:[%s5 + $0x68] sm:$0xff]
    %v269 = vld [vmem:[%s5 + $0x70] sm:$0xff]
    %v270 = vld [vmem:[%s5 + $0x78] sm:$0xff]
    %v271 = vld [vmem:[%s6] sm:$0x1]
    %v273 = vlaneseq
    %v274 = vshrl.u32 %v273, 7
    %v275 = vsub.s32 0, %v274
    %v276 = vrot.slane %v271, %v275
    %278 = vmatprep.subr.mxu0 0.0
    %279 = vmatpush1.msra.mxu0 %v255
    %280 = vmatprep.subr.mxu0 0.0
    %281 = vmatpush1.msra.mxu0 %v256
    %282 = vmatprep.subr.mxu0 0.0
    %283 = vmatpush1.msra.mxu0 %v257
    %284 = vmatprep.subr.mxu0 0.0
    %285 = vmatpush1.msra.mxu0 %v258
    %286 = vmatprep.subr.mxu0 0.0
    %287 = vmatpush1.msra.mxu0 %v259
    %288 = vmatprep.subr.mxu0 0.0
    %289 = vmatpush1.msra.mxu0 %v260
    %290 = vmatprep.subr.mxu0 0.0
    %291 = vmatpush1.msra.mxu0 %v261
    %292 = vmatprep.subr.mxu0 0.0
    %293 = vmatpush1.msra.mxu0 %v262
    %294 = vmatprep.subr.mxu0 0.0
    %295 = vmatpush1.msra.mxu0 %v263
    %296 = vmatprep.subr.mxu0 0.0
    %297 = vmatpush1.msra.mxu0 %v264
    %298 = vmatprep.subr.mxu0 0.0
    %299 = vmatpush1.msra.mxu0 %v265
    %300 = vmatprep.subr.mxu0 0.0
    %301 = vmatpush1.msra.mxu0 %v266
    %302 = vmatprep.subr.mxu0 0.0
    %303 = vmatpush1.msra.mxu0 %v267
    %304 = vmatprep.subr.mxu0 0.0
    %305 = vmatpush1.msra.mxu0 %v268
    %306 = vmatprep.subr.mxu0 0.0
    %307 = vmatpush1.msra.mxu0 %v269
    %308 = vmatprep.subr.mxu0 0.0
    %309 = vmatpush1.msra.mxu0 %v270
    %310 = vmatprep.subr.mxu0 0.0
    %311 = vmatpush1.msra.mxu0 0.0
    %312 = vmatprep.subr.mxu0 0.0
    %313 = vmatpush1.msra.mxu0 0.0
    %314 = vmatprep.subr.mxu0 0.0
    %315 = vmatpush1.msra.mxu0 0.0
    %316 = vmatprep.subr.mxu0 0.0
    %317 = vmatpush1.msra.mxu0 0.0
    %318 = vmatprep.subr.mxu0 0.0
    %319 = vmatpush1.msra.mxu0 0.0
    %320 = vmatprep.subr.mxu0 0.0
    %321 = vmatpush1.msra.mxu0 0.0
    %322 = vmatprep.subr.mxu0 0.0
    %323 = vmatpush1.msra.mxu0 0.0
    %324 = vmatprep.subr.mxu0 0.0
    %325 = vmatpush1.msra.mxu0 0.0
    %326 = vmatprep.subr.mxu0 0.0
    %327 = vmatpush1.msra.mxu0 0.0
    %328 = vmatprep.subr.mxu0 0.0
    %329 = vmatpush1.msra.mxu0 0.0
    %330 = vmatprep.subr.mxu0 0.0
    %331 = vmatpush1.msra.mxu0 0.0
    %332 = vmatprep.subr.mxu0 0.0
    %333 = vmatpush1.msra.mxu0 0.0
    %334 = vmatprep.subr.mxu0 0.0
    %335 = vmatpush1.msra.mxu0 0.0
    %336 = vmatprep.subr.mxu0 0.0
    %337 = vmatpush1.msra.mxu0 0.0
    %338 = vmatprep.subr.mxu0 0.0
    %339 = vmatpush1.msra.mxu0 0.0
    %340 = vmatprep.subr.mxu0 0.0
    %341 = vmatpush1.msra.mxu0 0.0
    %342 = vmatprep.mubr.f32.mxu0 0.0
    %343 = vmatmul.mubr.f32.gmra.mrb[0].mxu0 %v253
    %v344 = vpop.f32.mrb[0].mxu0
    %v345 = vadd.f32 %v276, %v344
    %v346 = vpop.f32.mrb[0].mxu0
    %347 = vmatprep.mubr.f32.mxu0 0.0
    %348 = vmatmul.mubr.f32.gmra.mrb[0].mxu0 %v254
    %v349 = vpop.f32.mrb[0].mxu0
    %v350 = vadd.f32 %v276, %v349
    %v351 = vpop.f32.mrb[0].mxu0
    %352 = vdwg.mxu0
    %v353 = vmax.f32 %v345, 0.0
    %v354 = vmax.f32 %v350, 0.0
    %v355 = vld [vmem:[%s7] sm:$0xf]
    %v356 = vld [vmem:[%s8] sm:$0xf]
    %358 = vset.pattern.permute.xlu0 0
    %359 = vperm.xlu0 %358, %v356
    %v360 = vpop.permute.xlu0 %359
    %vm362 = vcmask 261120
    %v364 = vsel %vm362, %v355, 0
    %v367 = vsel %vm362, %v353, 0
    %v370 = vsel %vm362, %v354, 0
    %372 = vmatprep.subr.mxu0 0.0
    %373 = vmatpush1.xpose.msra.mxu0 %v367
    %374 = vmatprep.subr.mxu0 0.0
    %375 = vmatpush1.xpose.msra.mxu0 %v370
    %376 = vmatprep.subr.mxu0 0.0
    %377 = vmatpush1.xpose.msra.mxu0 0.0
    %378 = vmatprep.subr.mxu0 0.0
    %379 = vmatpush1.xpose.msra.mxu0 0.0
    %380 = vmatprep.subr.mxu0 0.0
    %381 = vmatpush1.xpose.msra.mxu0 0.0
    %382 = vmatprep.subr.mxu0 0.0
    %383 = vmatpush1.xpose.msra.mxu0 0.0
    %384 = vmatprep.subr.mxu0 0.0
    %385 = vmatpush1.xpose.msra.mxu0 0.0
    %386 = vmatprep.subr.mxu0 0.0
    %387 = vmatpush1.xpose.msra.mxu0 0.0
    %388 = vmatprep.subr.mxu0 0.0
    %389 = vmatpush1.xpose.msra.mxu0 0.0
    %390 = vmatprep.subr.mxu0 0.0
    %391 = vmatpush1.xpose.msra.mxu0 0.0
    %392 = vmatprep.subr.mxu0 0.0
    %393 = vmatpush1.xpose.msra.mxu0 0.0
    %394 = vmatprep.subr.mxu0 0.0
    %395 = vmatpush1.xpose.msra.mxu0 0.0
    %396 = vmatprep.subr.mxu0 0.0
    %397 = vmatpush1.xpose.msra.mxu0 0.0
    %398 = vmatprep.subr.mxu0 0.0
    %399 = vmatpush1.xpose.msra.mxu0 0.0
    %400 = vmatprep.subr.mxu0 0.0
    %401 = vmatpush1.xpose.msra.mxu0 0.0
    %402 = vmatprep.subr.mxu0 0.0
    %403 = vmatpush1.xpose.msra.mxu0 0.0
    %404 = vmatprep.subr.mxu0 0.0
    %405 = vmatpush1.xpose.msra.mxu0 0.0
    %406 = vmatprep.subr.mxu0 0.0
    %407 = vmatpush1.xpose.msra.mxu0 0.0
    %408 = vmatprep.subr.mxu0 0.0
    %409 = vmatpush1.xpose.msra.mxu0 0.0
    %410 = vmatprep.subr.mxu0 0.0
    %411 = vmatpush1.xpose.msra.mxu0 0.0
    %412 = vmatprep.subr.mxu0 0.0
    %413 = vmatpush1.xpose.msra.mxu0 0.0
    %414 = vmatprep.subr.mxu0 0.0
    %415 = vmatpush1.xpose.msra.mxu0 0.0
    %416 = vmatprep.subr.mxu0 0.0
    %417 = vmatpush1.xpose.msra.mxu0 0.0
    %418 = vmatprep.subr.mxu0 0.0
    %419 = vmatpush1.xpose.msra.mxu0 0.0
    %420 = vmatprep.subr.mxu0 0.0
    %421 = vmatpush1.xpose.msra.mxu0 0.0
    %422 = vmatprep.subr.mxu0 0.0
    %423 = vmatpush1.xpose.msra.mxu0 0.0
    %424 = vmatprep.subr.mxu0 0.0
    %425 = vmatpush1.xpose.msra.mxu0 0.0
    %426 = vmatprep.subr.mxu0 0.0
    %427 = vmatpush1.xpose.msra.mxu0 0.0
    %428 = vmatprep.subr.mxu0 0.0
    %429 = vmatpush1.xpose.msra.mxu0 0.0
    %430 = vmatprep.subr.mxu0 0.0
    %431 = vmatpush1.xpose.msra.mxu0 0.0
    %432 = vmatprep.subr.mxu0 0.0
    %433 = vmatpush1.xpose.msra.mxu0 0.0
    %434 = vmatprep.subr.mxu0 0.0
    %435 = vmatpush1.xpose.msra.mxu0 0.0
    %436 = vmatprep.mubr.f32.mxu0 0.0
    %437 = vmatmul.mubr.f32.gmra.mrb[0].mxu0 %v364
    %v438 = vpop.f32.mrb[0].mxu0
    %v439 = vadd.f32 %v360, %v438
    %v440 = vpop.f32.mrb[0].mxu0
    %441 = vdwg.mxu0
    %vm442 = vcmask 125952
    %443 = vst.msk [vmem:[#allocation2] sm:$0xf] %vm442, %v439
    // Predicated region
    $region38: #{dqn_forward.1} parent=1 // pred_check
      _
    $region39: #{dqn_forward.1} parent=1 // pred_check_branch
      %445 = sbr.rel (0) target = $region41
    $region40: #{dqn_forward.1} parent=1 // pred_region
      %s447 = ssub.s32 64, 64
      %448 = vsyncadd [#allocation3], %s447
      %s450 = sshll.u32 [#allocation2], 4
      %s451 = int_to_ptr.vmem [resolvable:$true] %s450
      %453 = dma.vmem_to_hbm [thread:$0]  %s451, 64, %s9, [#allocation3]
    $region41: #{dqn_forward.1} parent=1 // pred_fallthru
      _
    // Predicated region
    $region42: #{dqn_forward.1} parent=1 // pred_check
      _
    $region43: #{dqn_forward.1} parent=1 // pred_check_branch
      %455 = sbr.rel (0) target = $region45
    $region44: #{dqn_forward.1} parent=1 // pred_region
      %456 = dma.done [#allocation3], 64
    $region45: #{dqn_forward.1} parent=1 // pred_fallthru
      _
    %457 = vsyncpa [#allocation3], 1

</llo_original>
